<compile_context>
chip_gen: v5e
topology: v5e:2x2
jax: 0.10.0
libtpu: 0.0.40
codegen_flags: <defaults>
</compile_context>

<pallas_src>
import functools

import jax
import jax.numpy as jnp
from jax import lax
from jax.experimental import pallas as pl
from jax.experimental.pallas import tpu as pltpu


def _round_up(x, m):
    return (x + m - 1) // m * m


def _block_diag_replicate(mat, p):
    """kron(I_p, mat): (a, b) -> (p*a, p*b) with `mat` on the diagonal blocks."""
    a, b = mat.shape
    eye = jnp.eye(p, dtype=mat.dtype)
    return jnp.einsum("pq,ab->paqb", eye, mat).reshape(p * a, p * b)


def pack_regression_params(w1, b1, w2, b2):
    """Build packed (block-diagonal, lane-dense, bf16) weights ONCE, outside the forward jit."""
    D, H = w1.shape
    K = w2.shape[1]
    P = 128 // D if (D <= 128 and 128 % D == 0) else 1   # hits packed per 128-lane row
    PK = P * K
    w2_cols = _round_up(PK, 128)                          # MXU-aligned 2nd-matmul N
    w1_bd = _block_diag_replicate(w1.astype(jnp.float32), P).astype(jnp.bfloat16)
    w2_bd = _block_diag_replicate(w2.astype(jnp.float32), P)
    w2_bd = jnp.pad(w2_bd, ((0, 0), (0, w2_cols - PK))).astype(jnp.bfloat16)
    b1_p = jnp.tile(b1.reshape(1, H).astype(jnp.float32), (1, P))     # (1, P*H)
    b2_p = jnp.tile(b2.reshape(1, K).astype(jnp.float32), (1, P))     # (1, P*K)
    return w1_bd, b1_p, w2_bd, b2_p


def _dense_mlp_kernel(x_ref, w1_ref, b1_ref, w2_ref, b2_ref, o_ref, *,
                      chunk, n_chunks, out_cols):
    # x_ref : (tile_r, P*D)  f32   packed hit embeddings (P hits per row)
    # w1_ref: (P*D, P*H)     bf16  block-diag-replicated first linear weight
    # b1_ref: (1, P*H)       f32   first bias, tiled P times
    # w2_ref: (P*H, Wc)      bf16  block-diag-replicated second weight, N padded to 128
    # b2_ref: (1, P*K)       f32   second bias, tiled P times
    # o_ref : (tile_r, P*K)  f32   per-hit regression outputs (hit-major, field-minor)

    # Grid-invariant loads hoisted out of the (possibly unrolled) loop body.
    w1 = w1_ref[...]
    w2 = w2_ref[...]
    b1 = b1_ref[...]
    b2 = b2_ref[...]

    def body(c, carry):
        r0 = pl.multiple_of(c * chunk, chunk)
        # In-kernel bf16 cast (saves a whole host-side HBM convert pass).
        x = x_ref[pl.ds(r0, chunk), :].astype(jnp.bfloat16)     # (chunk, P*D)
        h = jnp.dot(x, w1, preferred_element_type=jnp.float32)  # MXU, f32 accum
        h = h + b1                                               # f32 bias add
        a = h * jax.nn.sigmoid(h)                                # SiLU in f32 (VPU + EUP)
        y = jnp.dot(a.astype(jnp.bfloat16), w2,                  # MXU, f32 accum
                    preferred_element_type=jnp.float32)
        o_ref[pl.ds(r0, chunk), :] = y[:, :out_cols] + b2
        return carry

    lax.fori_loop(0, n_chunks, body, 0, unroll=min(n_chunks, 4))


def regression_task_forward(x_embed, w1_bd, b1_p, w2_bd, b2_p, *, tile_rows=4096):
    """x_embed: (B, N, D) -> regression latent (B, N, K) f32, using pre-packed params."""
    B, N, D = x_embed.shape
    PD, PH = w1_bd.shape
    w2_cols = w2_bd.shape[1]
    PK = b2_p.shape[1]
    P = PD // D
    K = PK // P
    M = B * N

    # Pack P hits per lane-dense 128-lane row: pure bitcast reshape, no HBM pass.
    x_flat = x_embed.reshape(M, D)
    if M % P != 0:
        # TODO(synk): rare ragged-P path; small pad keeps the packing reshape valid.
        x_flat = jnp.pad(x_flat, ((0, P - M % P), (0, 0)))
    M_packed = x_flat.shape[0]
    R = M_packed // P
    x_packed = x_flat.reshape(R, PD)

    # ---- tile sizing ---------------------------------------------------------
    # Biggest 128-multiple tile that (a) fits a conservative double-buffer VMEM
    # budget (safe under v5e's 16 MiB default scoped VMEM and v7x's 64 MiB phys),
    # (b) leaves >= 2 grid steps on larger problems (v7x has 2 TensorCores),
    # (c) does not exceed tile_rows.
    in_itemsize = jnp.dtype(x_packed.dtype).itemsize
    per_row_bytes = 2 * PD * in_itemsize + 2 * PK * 4     # dbl-buffered input + output
    vmem_budget = 12 * 1024 * 1024
    max_rows_vmem = max(128, (vmem_budget // per_row_bytes) // 128 * 128)

    R8 = _round_up(R, 8)
    tile_r = min(tile_rows, max_rows_vmem, R8)
    if tile_r > 128:
        tile_r = (tile_r // 128) * 128                     # integer number of 128-row chunks
    if R8 > 256:
        half = max(128, _round_up(pl.cdiv(R, 2), 128))     # >= 2 grid steps when possible
        tile_r = min(tile_r, half)
    chunk = min(tile_r, 128)
    n_chunks = tile_r // chunk

    grid = (pl.cdiv(R, tile_r),)                           # ragged tail handled by Pallas

    kernel = functools.partial(_dense_mlp_kernel, chunk=chunk,
                               n_chunks=n_chunks, out_cols=PK)

    out = pl.pallas_call(
        kernel,
        out_shape=jax.ShapeDtypeStruct((R, PK), jnp.float32),
        grid_spec=pltpu.PrefetchScalarGridSpec(
            num_scalar_prefetch=0,
            grid=grid,
            in_specs=[
                pl.BlockSpec((tile_r, PD), lambda i: (i, 0)),
                pl.BlockSpec((PD, PH), lambda i: (0, 0)),
                pl.BlockSpec((1, PH), lambda i: (0, 0)),
                pl.BlockSpec((PH, w2_cols), lambda i: (0, 0)),
                pl.BlockSpec((1, PK), lambda i: (0, 0)),
            ],
            out_specs=pl.BlockSpec((tile_r, PK), lambda i: (i, 0)),
        ),
        compiler_params=pltpu.CompilerParams(
            dimension_semantics=("parallel",),   # megacore-shardable on v7x
        ),
    )(x_packed, w1_bd, b1_p, w2_bd, b2_p)

    # Unpack: row r = [hit Pr | hit Pr+1 | ...], K fields each -> (M, K) -> (B, N, K).
    out = out.reshape(M_packed, K)
    if M_packed != M:
        out = out[:M]
    return out.reshape(B, N, K)


def _reference_f32(x_embed, w1, b1, w2, b2):
    h = jnp.einsum("bnd,dh->bnh", x_embed, w1) + b1
    a = h * jax.nn.sigmoid(h)
    return jnp.einsum("bnh,hk->bnk", a, w2) + b2


def _reference_bf16(x_embed, w1, b1, w2, b2):
    # Mirrors the kernel's mixed precision: bf16 matmul inputs, f32 accumulation.
    h = jnp.einsum("bnd,dh->bnh", x_embed.astype(jnp.bfloat16),
                   w1.astype(jnp.bfloat16),
                   preferred_element_type=jnp.float32) + b1
    a = h * jax.nn.sigmoid(h)
    return jnp.einsum("bnh,hk->bnk", a.astype(jnp.bfloat16),
                      w2.astype(jnp.bfloat16),
                      preferred_element_type=jnp.float32) + b2


if __name__ == "__main__":
    # Small shapes consistent with the module: dim-32 object embeddings, 3 fields.
    B, N, D = 2, 256, 32
    H = 2 * D                       # Dense default hidden_dim_scale=2
    fields = ("px", "py", "pz")
    K = len(fields)
    output_object = "track"

    key = jax.random.PRNGKey(0)
    k_x, k_w1, k_b1, k_w2, k_b2 = jax.random.split(key, 5)

    x_embed = jax.random.normal(k_x, (B, N, D), dtype=jnp.float32)

    # Deterministic parameter init (PyTorch-Linear-style uniform bounds).
    bound1 = 1.0 / (D ** 0.5)
    bound2 = 1.0 / (H ** 0.5)
    w1 = jax.random.uniform(k_w1, (D, H), jnp.float32, -bound1, bound1)
    b1 = jax.random.uniform(k_b1, (H,), jnp.float32, -bound1, bound1)
    w2 = jax.random.uniform(k_w2, (H, K), jnp.float32, -bound2, bound2)
    b2 = jax.random.uniform(k_b2, (K,), jnp.float32, -bound2, bound2)

    # Pack weights ONCE (block-diag replicate, bf16, lane pad) outside the forward jit.
    packed = jax.block_until_ready(pack_regression_params(w1, b1, w2, b2))

    forward = jax.jit(functools.partial(regression_task_forward, tile_rows=4096))
    latent = forward(x_embed, *packed)
    latent = jax.block_until_ready(latent)

    outputs = {f"{output_object}_regr": latent}     # RegressionTask.forward return dict
    assert outputs[f"{output_object}_regr"].shape == (B, N, K)

    ref16 = _reference_bf16(x_embed, w1, b1, w2, b2)
    ref32 = _reference_f32(x_embed, w1, b1, w2, b2)
    assert jnp.allclose(latent, ref16, atol=5e-3, rtol=5e-3), "mismatch vs bf16-matched reference"
    assert jnp.allclose(latent, ref32, atol=2e-2, rtol=2e-2), "mismatch vs f32 reference"

    print("KERNEL_OK")
</pallas_src>

<mosaic_0001>
module attributes {stable_mosaic.version = 11 : i64} {
  func.func @_dense_mlp_kernel(%arg0: i32, %arg1: memref<128x128xf32, #tpu.memory_space<vmem>>, %arg2: memref<128x256xbf16, #tpu.memory_space<vmem>>, %arg3: memref<1x256xf32, #tpu.memory_space<vmem>>, %arg4: memref<256x128xbf16, #tpu.memory_space<vmem>>, %arg5: memref<1x12xf32, #tpu.memory_space<vmem>>, %arg6: memref<128x12xf32, #tpu.memory_space<vmem>>) attributes {dimension_semantics = [#tpu.dimension_semantics<parallel>], iteration_bounds = array<i64: 1>, scalar_prefetch = 0 : i64, scratch_operands = 0 : i64, tpu.core_type = #tpu.core_type<tc>, window_params = [{transform_indices = @transform_0, window_bounds = array<i64: 128, 128>}, {pipeline_mode = #tpu.pipeline_mode<synchronous>, transform_indices = @transform_1, window_bounds = array<i64: 128, 256>}, {pipeline_mode = #tpu.pipeline_mode<synchronous>, transform_indices = @transform_2, window_bounds = array<i64: 1, 256>}, {pipeline_mode = #tpu.pipeline_mode<synchronous>, transform_indices = @transform_3, window_bounds = array<i64: 256, 128>}, {pipeline_mode = #tpu.pipeline_mode<synchronous>, transform_indices = @transform_4, window_bounds = array<i64: 1, 12>}, {transform_indices = @transform_5, window_bounds = array<i64: 128, 12>}]} {
    %c0 = arith.constant 0 : index
    %c0_0 = arith.constant 0 : index
    %0 = vector.load %arg2[%c0, %c0_0] : memref<128x256xbf16, #tpu.memory_space<vmem>>, vector<128x256xbf16>
    %c0_1 = arith.constant 0 : index
    %c0_2 = arith.constant 0 : index
    %1 = vector.load %arg4[%c0_1, %c0_2] : memref<256x128xbf16, #tpu.memory_space<vmem>>, vector<256x128xbf16>
    %c0_3 = arith.constant 0 : index
    %c0_4 = arith.constant 0 : index
    %2 = vector.load %arg3[%c0_3, %c0_4] : memref<1x256xf32, #tpu.memory_space<vmem>>, vector<1x256xf32>
    %c0_5 = arith.constant 0 : index
    %c0_6 = arith.constant 0 : index
    %3 = vector.load %arg5[%c0_5, %c0_6] : memref<1x12xf32, #tpu.memory_space<vmem>>, vector<1x12xf32>
    %c0_i32 = arith.constant 0 : i32
    %c128_i32 = arith.constant 128 : i32
    %4 = arith.muli %c0_i32, %c128_i32 : i32
    %5 = tpu.assume_multiple %4, 128 : i32
    %6 = arith.index_cast %5 : i32 to index
    %c0_7 = arith.constant 0 : index
    %7 = vector.load %arg1[%6, %c0_7] : memref<128x128xf32, #tpu.memory_space<vmem>>, vector<128x128xf32>
    %8 = arith.truncf %7 : vector<128x128xf32> to vector<128x128xbf16>
    %cst = arith.constant dense<0.000000e+00> : vector<128x256xf32>
    %9 = tpu.matmul %8, %0, %cst {dimension_numbers = #tpu.dot_dimension_numbers<[1], [0], [0], [1], [0, 0, 1, 1], [], []>} : vector<128x128xbf16>, vector<128x256xbf16>, vector<128x256xf32> -> vector<128x256xf32>
    %10 = vector.broadcast %2 : vector<1x256xf32> to vector<128x256xf32>
    %11 = arith.addf %9, %10 : vector<128x256xf32>
    %12 = arith.negf %11 : vector<128x256xf32>
    %13 = math.exp %12 : vector<128x256xf32>
    %cst_8 = arith.constant 1.000000e+00 : f32
    %14 = vector.broadcast %cst_8 : f32 to vector<128x256xf32>
    %15 = arith.addf %14, %13 : vector<128x256xf32>
    %16 = arith.divf %14, %15 : vector<128x256xf32>
    %17 = arith.mulf %11, %16 : vector<128x256xf32>
    %18 = arith.truncf %17 : vector<128x256xf32> to vector<128x256xbf16>
    %cst_9 = arith.constant dense<0.000000e+00> : vector<128x128xf32>
    %19 = tpu.matmul %18, %1, %cst_9 {dimension_numbers = #tpu.dot_dimension_numbers<[1], [0], [0], [1], [0, 0, 1, 1], [], []>} : vector<128x256xbf16>, vector<256x128xbf16>, vector<128x128xf32> -> vector<128x128xf32>
    %20 = vector.extract_strided_slice %19 {offsets = [0, 0], sizes = [128, 12], strides = [1, 1]} : vector<128x128xf32> to vector<128x12xf32>
    %21 = vector.broadcast %3 : vector<1x12xf32> to vector<128x12xf32>
    %22 = arith.addf %20, %21 : vector<128x12xf32>
    %23 = arith.index_cast %5 : i32 to index
    %c0_10 = arith.constant 0 : index
    %24 = vector.load %arg6[%23, %c0_10] : memref<128x12xf32, #tpu.memory_space<vmem>>, vector<128x12xf32>
    tpu.vector_store %arg6[%23, %c0_10], %22 {strides = array<i32>} : memref<128x12xf32, #tpu.memory_space<vmem>>, vector<128x12xf32>,
    %c1_i32 = arith.constant 1 : i32
    return
  }
  func.func @transform_0(%arg0: i32) -> (i32, i32) {
    %c0_i32 = arith.constant 0 : i32
    %c0_i32_0 = arith.constant 0 : i32
    return %arg0, %c0_i32 : i32, i32
  }
  func.func @transform_1(%arg0: i32) -> (i32, i32) {
    %c0_i32 = arith.constant 0 : i32
    %c0_i32_0 = arith.constant 0 : i32
    %c0_i32_1 = arith.constant 0 : i32
    return %c0_i32, %c0_i32_0 : i32, i32
  }
  func.func @transform_2(%arg0: i32) -> (i32, i32) {
    %c0_i32 = arith.constant 0 : i32
    %c0_i32_0 = arith.constant 0 : i32
    %c0_i32_1 = arith.constant 0 : i32
    return %c0_i32, %c0_i32_0 : i32, i32
  }
  func.func @transform_3(%arg0: i32) -> (i32, i32) {
    %c0_i32 = arith.constant 0 : i32
    %c0_i32_0 = arith.constant 0 : i32
    %c0_i32_1 = arith.constant 0 : i32
    return %c0_i32, %c0_i32_0 : i32, i32
  }
  func.func @transform_4(%arg0: i32) -> (i32, i32) {
    %c0_i32 = arith.constant 0 : i32
    %c0_i32_0 = arith.constant 0 : i32
    %c0_i32_1 = arith.constant 0 : i32
    return %c0_i32, %c0_i32_0 : i32, i32
  }
  func.func @transform_5(%arg0: i32) -> (i32, i32) {
    %c0_i32 = arith.constant 0 : i32
    %c0_i32_0 = arith.constant 0 : i32
    return %arg0, %c0_i32 : i32, i32
  }
}

</mosaic_0001>

<llo_original>
// kernel: regression_task_forward.1
$region0: #{regression_task_forward.1}
  #allocation0 [shape = 'u32[]', space=smem, size = 0x4, offset = 0x4, fixed_abs, tag = 'smem constant byte address 0x4 - core index']
  #allocation1 [shape = 'u32[72,128]{1,0:T(1,128)}', space=vmem, size = 0x9000, scoped, tag = 'internal scratch']
  %s0 = inlined_call_operand.vmem [shape: f32[128,128], index: 0, kind: input, shape index: {}]
  %s1 = inlined_call_operand.vmem [shape: bf16[128,256], index: 1, kind: input, shape index: {}]
  %s2 = inlined_call_operand.vmem [shape: f32[1,256], index: 2, kind: input, shape index: {}]
  %s3 = inlined_call_operand.vmem [shape: bf16[256,128], index: 3, kind: input, shape index: {}]
  %s4 = inlined_call_operand.vmem [shape: f32[1,12], index: 4, kind: input, shape index: {}]
  %s5 = inlined_call_operand.vmem [shape: f32[128,12], index: 5, kind: output, shape index: {}]
  %s6 = sld [smem:[#allocation0]]
  $region30: #{regression_task_forward.1} parent=0
    _
  %s8 = ssub.s32 1, %s6
  %s9 = scalar_select 0, %s8, %s6
  // Predicated region
  $region2: #{regression_task_forward.1} parent=0 // pred_check
    _
  $region3: #{regression_task_forward.1} parent=0 // pred_check_branch
    %11 = sbr.rel (0) target = $region5
  $region4: #{regression_task_forward.1} parent=0 // pred_region
    _
  $region5: #{regression_task_forward.1} parent=0 // pred_fallthru
    _
  // Predicated region
  $region6: #{regression_task_forward.1} parent=0 // pred_check
    _
  $region7: #{regression_task_forward.1} parent=0 // pred_check_branch
    %13 = sbr.rel (0) target = $region9
  $region8: #{regression_task_forward.1} parent=0 // pred_region
    _
  $region9: #{regression_task_forward.1} parent=0 // pred_fallthru
    _
  // Predicated region
  $region10: #{regression_task_forward.1} parent=0 // pred_check
    _
  $region11: #{regression_task_forward.1} parent=0 // pred_check_branch
    %15 = sbr.rel (0) target = $region13
  $region12: #{regression_task_forward.1} parent=0 // pred_region
    _
  $region13: #{regression_task_forward.1} parent=0 // pred_fallthru
    _
  // Predicated region
  $region14: #{regression_task_forward.1} parent=0 // pred_check
    _
  $region15: #{regression_task_forward.1} parent=0 // pred_check_branch
    %17 = sbr.rel (0) target = $region17
  $region16: #{regression_task_forward.1} parent=0 // pred_region
    _
  $region17: #{regression_task_forward.1} parent=0 // pred_fallthru
    _
  // Predicated region
  $region18: #{regression_task_forward.1} parent=0 // pred_check
    _
  $region19: #{regression_task_forward.1} parent=0 // pred_check_branch
    %19 = sbr.rel (0) target = $region21
  $region20: #{regression_task_forward.1} parent=0 // pred_region
    _
  $region21: #{regression_task_forward.1} parent=0 // pred_fallthru
    _
  %v20 = vld [vmem:[%s1] sm:$0xff]
  %v21 = vld [vmem:[%s1 + $0x8] sm:$0xff]
  %v22 = vld [vmem:[%s1 + $0x10] sm:$0xff]
  %v23 = vld [vmem:[%s1 + $0x18] sm:$0xff]
  %v24 = vld [vmem:[%s1 + $0x20] sm:$0xff]
  %v25 = vld [vmem:[%s1 + $0x28] sm:$0xff]
  %v26 = vld [vmem:[%s1 + $0x30] sm:$0xff]
  %v27 = vld [vmem:[%s1 + $0x38] sm:$0xff]
  %v28 = vld [vmem:[%s1 + $0x40] sm:$0xff]
  %v29 = vld [vmem:[%s1 + $0x48] sm:$0xff]
  %v30 = vld [vmem:[%s1 + $0x50] sm:$0xff]
  %v31 = vld [vmem:[%s1 + $0x58] sm:$0xff]
  %v32 = vld [vmem:[%s1 + $0x60] sm:$0xff]
  %v33 = vld [vmem:[%s1 + $0x68] sm:$0xff]
  %v34 = vld [vmem:[%s1 + $0x70] sm:$0xff]
  %v35 = vld [vmem:[%s1 + $0x78] sm:$0xff]
  %v36 = vld [vmem:[%s3] sm:$0xf]
  %v37 = vld [vmem:[%s3 + $0x4] sm:$0xf]
  %v38 = vld [vmem:[%s3 + $0x8] sm:$0xf]
  %v39 = vld [vmem:[%s3 + $0xc] sm:$0xf]
  %v40 = vld [vmem:[%s3 + $0x10] sm:$0xf]
  %v41 = vld [vmem:[%s3 + $0x14] sm:$0xf]
  %v42 = vld [vmem:[%s3 + $0x18] sm:$0xf]
  %v43 = vld [vmem:[%s3 + $0x1c] sm:$0xf]
  %v44 = vld [vmem:[%s3 + $0x20] sm:$0xf]
  %v45 = vld [vmem:[%s3 + $0x24] sm:$0xf]
  %v46 = vld [vmem:[%s3 + $0x28] sm:$0xf]
  %v47 = vld [vmem:[%s3 + $0x2c] sm:$0xf]
  %v48 = vld [vmem:[%s3 + $0x30] sm:$0xf]
  %v49 = vld [vmem:[%s3 + $0x34] sm:$0xf]
  %v50 = vld [vmem:[%s3 + $0x38] sm:$0xf]
  %v51 = vld [vmem:[%s3 + $0x3c] sm:$0xf]
  %v52 = vld [vmem:[%s3 + $0x40] sm:$0xf]
  %v53 = vld [vmem:[%s3 + $0x44] sm:$0xf]
  %v54 = vld [vmem:[%s3 + $0x48] sm:$0xf]
  %v55 = vld [vmem:[%s3 + $0x4c] sm:$0xf]
  %v56 = vld [vmem:[%s3 + $0x50] sm:$0xf]
  %v57 = vld [vmem:[%s3 + $0x54] sm:$0xf]
  %v58 = vld [vmem:[%s3 + $0x58] sm:$0xf]
  %v59 = vld [vmem:[%s3 + $0x5c] sm:$0xf]
  %v60 = vld [vmem:[%s3 + $0x60] sm:$0xf]
  %v61 = vld [vmem:[%s3 + $0x64] sm:$0xf]
  %v62 = vld [vmem:[%s3 + $0x68] sm:$0xf]
  %v63 = vld [vmem:[%s3 + $0x6c] sm:$0xf]
  %v64 = vld [vmem:[%s3 + $0x70] sm:$0xf]
  %v65 = vld [vmem:[%s3 + $0x74] sm:$0xf]
  %v66 = vld [vmem:[%s3 + $0x78] sm:$0xf]
  %v67 = vld [vmem:[%s3 + $0x7c] sm:$0xf]
  %v68 = vld [vmem:[%s2] sm:$0x3]
  %v69 = vld [vmem:[%s4] sm:$0x1]
  %v70 = vld [vmem:[%s0] sm:$0xff]
  %v71 = vld [vmem:[%s0 + $0x8] sm:$0xff]
  %v72 = vld [vmem:[%s0 + $0x10] sm:$0xff]
  %v73 = vld [vmem:[%s0 + $0x18] sm:$0xff]
  %v74 = vld [vmem:[%s0 + $0x20] sm:$0xff]
  %v75 = vld [vmem:[%s0 + $0x28] sm:$0xff]
  %v76 = vld [vmem:[%s0 + $0x30] sm:$0xff]
  %v77 = vld [vmem:[%s0 + $0x38] sm:$0xff]
  %v78 = vld [vmem:[%s0 + $0x40] sm:$0xff]
  %v79 = vld [vmem:[%s0 + $0x48] sm:$0xff]
  %v80 = vld [vmem:[%s0 + $0x50] sm:$0xff]
  %v81 = vld [vmem:[%s0 + $0x58] sm:$0xff]
  %v82 = vld [vmem:[%s0 + $0x60] sm:$0xff]
  %v83 = vld [vmem:[%s0 + $0x68] sm:$0xff]
  %v84 = vld [vmem:[%s0 + $0x70] sm:$0xff]
  %v85 = vld [vmem:[%s0 + $0x78] sm:$0xff]
  %v86 = vpack.c.bf16 %v71, %v70
  %v87 = vpack.c.bf16 %v73, %v72
  %v88 = vpack.c.bf16 %v75, %v74
  %v89 = vpack.c.bf16 %v77, %v76
  %v90 = vpack.c.bf16 %v79, %v78
  %v91 = vpack.c.bf16 %v81, %v80
  %v92 = vpack.c.bf16 %v83, %v82
  %v93 = vpack.c.bf16 %v85, %v84
  %v95 = vperm.slane %v68, 0
  %v96 = vperm.slane %v68, 1
  %v115 = vunpack.c.l.b16 %v20
  %v116 = vunpack.c.h.b16 %v20
  %v117 = vunpack.c.l.b16 %v21
  %v118 = vunpack.c.h.b16 %v21
  %v119 = vunpack.c.l.b16 %v22
  %v120 = vunpack.c.h.b16 %v22
  %v121 = vunpack.c.l.b16 %v23
  %v122 = vunpack.c.h.b16 %v23
  %v123 = vunpack.c.l.b16 %v24
  %v124 = vunpack.c.h.b16 %v24
  %v125 = vunpack.c.l.b16 %v25
  %v126 = vunpack.c.h.b16 %v25
  %v127 = vunpack.c.l.b16 %v26
  %v128 = vunpack.c.h.b16 %v26
  %v129 = vunpack.c.l.b16 %v27
  %v130 = vunpack.c.h.b16 %v27
  %v131 = vunpack.c.l.b16 %v28
  %v132 = vunpack.c.h.b16 %v28
  %v133 = vunpack.c.l.b16 %v29
  %v134 = vunpack.c.h.b16 %v29
  %v135 = vunpack.c.l.b16 %v30
  %v136 = vunpack.c.h.b16 %v30
  %v137 = vunpack.c.l.b16 %v31
  %v138 = vunpack.c.h.b16 %v31
  %v139 = vunpack.c.l.b16 %v32
  %v140 = vunpack.c.h.b16 %v32
  %v141 = vunpack.c.l.b16 %v33
  %v142 = vunpack.c.h.b16 %v33
  %v143 = vunpack.c.l.b16 %v34
  %v144 = vunpack.c.h.b16 %v34
  %v145 = vunpack.c.l.b16 %v35
  %v146 = vunpack.c.h.b16 %v35
  %v147 = vpack.c.b16 %v117, %v115
  %v148 = vpack.c.b16 %v118, %v116
  %v149 = vpack.c.b16 %v121, %v119
  %v150 = vpack.c.b16 %v122, %v120
  %v151 = vpack.c.b16 %v125, %v123
  %v152 = vpack.c.b16 %v126, %v124
  %v153 = vpack.c.b16 %v129, %v127
  %v154 = vpack.c.b16 %v130, %v128
  %v155 = vpack.c.b16 %v133, %v131
  %v156 = vpack.c.b16 %v134, %v132
  %v157 = vpack.c.b16 %v137, %v135
  %v158 = vpack.c.b16 %v138, %v136
  %v159 = vpack.c.b16 %v141, %v139
  %v160 = vpack.c.b16 %v142, %v140
  %v161 = vpack.c.b16 %v145, %v143
  %v162 = vpack.c.b16 %v146, %v144
  %179 = vmatpush.bf16.msra.mxu0 %v161
  %180 = vmatpush.bf16.msra.mxu0 %v159
  %181 = vmatpush.bf16.msra.mxu0 %v157
  %182 = vmatpush.bf16.msra.mxu0 %v155
  %183 = vmatpush.bf16.msra.mxu0 %v153
  %184 = vmatpush.bf16.msra.mxu0 %v151
  %185 = vmatpush.bf16.msra.mxu0 %v149
  %186 = vmatpush.bf16.msra.mxu0 %v147
  %187 = vmatmul.bf16.gmra.mxu0 %v86
  %v188 = vpop.f32.mrf.mxu0
  %v189 = vadd.f32 %v95, %v188
  %v190 = vpop.f32.mrf.mxu0
  %v191 = vadd.f32 %v95, %v190
  %192 = vmatmul.bf16.gmra.mxu0 %v87
  %v193 = vpop.f32.mrf.mxu0
  %v194 = vadd.f32 %v95, %v193
  %v195 = vpop.f32.mrf.mxu0
  %v196 = vadd.f32 %v95, %v195
  %197 = vmatmul.bf16.gmra.mxu0 %v88
  %v198 = vpop.f32.mrf.mxu0
  %v199 = vadd.f32 %v95, %v198
  %v200 = vpop.f32.mrf.mxu0
  %v201 = vadd.f32 %v95, %v200
  %202 = vmatmul.bf16.gmra.mxu0 %v89
  %v203 = vpop.f32.mrf.mxu0
  %v204 = vadd.f32 %v95, %v203
  %v205 = vpop.f32.mrf.mxu0
  %v206 = vadd.f32 %v95, %v205
  %207 = vmatmul.bf16.gmra.mxu0 %v90
  %v208 = vpop.f32.mrf.mxu0
  %v209 = vadd.f32 %v95, %v208
  %v210 = vpop.f32.mrf.mxu0
  %v211 = vadd.f32 %v95, %v210
  %212 = vmatmul.bf16.gmra.mxu0 %v91
  %v213 = vpop.f32.mrf.mxu0
  %v214 = vadd.f32 %v95, %v213
  %v215 = vpop.f32.mrf.mxu0
  %v216 = vadd.f32 %v95, %v215
  %217 = vmatmul.bf16.gmra.mxu0 %v92
  %v218 = vpop.f32.mrf.mxu0
  %v219 = vadd.f32 %v95, %v218
  %v220 = vpop.f32.mrf.mxu0
  %v221 = vadd.f32 %v95, %v220
  %222 = vmatmul.bf16.gmra.mxu0 %v93
  %v223 = vpop.f32.mrf.mxu0
  %v224 = vadd.f32 %v95, %v223
  %v225 = vpop.f32.mrf.mxu0
  %v226 = vadd.f32 %v95, %v225
  %227 = vdwg.mxu0
  %228 = vmatpush.bf16.msra.mxu0 %v162
  %229 = vmatpush.bf16.msra.mxu0 %v160
  %230 = vmatpush.bf16.msra.mxu0 %v158
  %231 = vmatpush.bf16.msra.mxu0 %v156
  %232 = vmatpush.bf16.msra.mxu0 %v154
  %233 = vmatpush.bf16.msra.mxu0 %v152
  %234 = vmatpush.bf16.msra.mxu0 %v150
  %235 = vmatpush.bf16.msra.mxu0 %v148
  %236 = vmatmul.bf16.gmra.mxu0 %v86
  %v237 = vpop.f32.mrf.mxu0
  %v238 = vadd.f32 %v96, %v237
  %v239 = vpop.f32.mrf.mxu0
  %v240 = vadd.f32 %v96, %v239
  %241 = vmatmul.bf16.gmra.mxu0 %v87
  %v242 = vpop.f32.mrf.mxu0
  %v243 = vadd.f32 %v96, %v242
  %v244 = vpop.f32.mrf.mxu0
  %v245 = vadd.f32 %v96, %v244
  %246 = vmatmul.bf16.gmra.mxu0 %v88
  %v247 = vpop.f32.mrf.mxu0
  %v248 = vadd.f32 %v96, %v247
  %v249 = vpop.f32.mrf.mxu0
  %v250 = vadd.f32 %v96, %v249
  %251 = vmatmul.bf16.gmra.mxu0 %v89
  %v252 = vpop.f32.mrf.mxu0
  %v253 = vadd.f32 %v96, %v252
  %v254 = vpop.f32.mrf.mxu0
  %v255 = vadd.f32 %v96, %v254
  %256 = vmatmul.bf16.gmra.mxu0 %v90
  %v257 = vpop.f32.mrf.mxu0
  %v258 = vadd.f32 %v96, %v257
  %v259 = vpop.f32.mrf.mxu0
  %v260 = vadd.f32 %v96, %v259
  %261 = vmatmul.bf16.gmra.mxu0 %v91
  %v262 = vpop.f32.mrf.mxu0
  %v263 = vadd.f32 %v96, %v262
  %v264 = vpop.f32.mrf.mxu0
  %v265 = vadd.f32 %v96, %v264
  %266 = vmatmul.bf16.gmra.mxu0 %v92
  %v267 = vpop.f32.mrf.mxu0
  %v268 = vadd.f32 %v96, %v267
  %v269 = vpop.f32.mrf.mxu0
  %v270 = vadd.f32 %v96, %v269
  %271 = vmatmul.bf16.gmra.mxu0 %v93
  %v272 = vpop.f32.mrf.mxu0
  %v273 = vadd.f32 %v96, %v272
  %v274 = vpop.f32.mrf.mxu0
  %v275 = vadd.f32 %v96, %v274
  %276 = vdwg.mxu0
  %v277 = vxor.u32 %v189, 2147483648
  %v278 = vxor.u32 %v238, 2147483648
  %v279 = vxor.u32 %v191, 2147483648
  %v280 = vxor.u32 %v240, 2147483648
  %v281 = vxor.u32 %v194, 2147483648
  %v282 = vxor.u32 %v243, 2147483648
  %v283 = vxor.u32 %v196, 2147483648
  %v284 = vxor.u32 %v245, 2147483648
  %v285 = vxor.u32 %v199, 2147483648
  %v286 = vxor.u32 %v248, 2147483648
  %v287 = vxor.u32 %v201, 2147483648
  %v288 = vxor.u32 %v250, 2147483648
  %v289 = vxor.u32 %v204, 2147483648
  %v290 = vxor.u32 %v253, 2147483648
  %v291 = vxor.u32 %v206, 2147483648
  %v292 = vxor.u32 %v255, 2147483648
  %v293 = vxor.u32 %v209, 2147483648
  %v294 = vxor.u32 %v258, 2147483648
  %v295 = vxor.u32 %v211, 2147483648
  %v296 = vxor.u32 %v260, 2147483648
  %v297 = vxor.u32 %v214, 2147483648
  %v298 = vxor.u32 %v263, 2147483648
  %v299 = vxor.u32 %v216, 2147483648
  %v300 = vxor.u32 %v265, 2147483648
  %v301 = vxor.u32 %v219, 2147483648
  %v302 = vxor.u32 %v268, 2147483648
  %v303 = vxor.u32 %v221, 2147483648
  %v304 = vxor.u32 %v270, 2147483648
  %v305 = vxor.u32 %v224, 2147483648
  %v306 = vxor.u32 %v273, 2147483648
  %v307 = vxor.u32 %v226, 2147483648
  %v308 = vxor.u32 %v275, 2147483648
  %v309 = vmul.f32 %v277, 1.442695
  %v310 = vpow.pop %v309
  %v311 = vmul.f32 %v278, 1.442695
  %v312 = vpow.pop %v311
  %v313 = vmul.f32 %v279, 1.442695
  %v314 = vpow.pop %v313
  %v315 = vmul.f32 %v280, 1.442695
  %v316 = vpow.pop %v315
  %v317 = vmul.f32 %v281, 1.442695
  %v318 = vpow.pop %v317
  %v319 = vmul.f32 %v282, 1.442695
  %v320 = vpow.pop %v319
  %v321 = vmul.f32 %v283, 1.442695
  %v322 = vpow.pop %v321
  %v323 = vmul.f32 %v284, 1.442695
  %v324 = vpow.pop %v323
  %v325 = vmul.f32 %v285, 1.442695
  %v326 = vpow.pop %v325
  %v327 = vmul.f32 %v286, 1.442695
  %v328 = vpow.pop %v327
  %v329 = vmul.f32 %v287, 1.442695
  %v330 = vpow.pop %v329
  %v331 = vmul.f32 %v288, 1.442695
  %v332 = vpow.pop %v331
  %v333 = vmul.f32 %v289, 1.442695
  %v334 = vpow.pop %v333
  %v335 = vmul.f32 %v290, 1.442695
  %v336 = vpow.pop %v335
  %v337 = vmul.f32 %v291, 1.442695
  %v338 = vpow.pop %v337
  %v339 = vmul.f32 %v292, 1.442695
  %v340 = vpow.pop %v339
  %v341 = vmul.f32 %v293, 1.442695
  %v342 = vpow.pop %v341
  %v343 = vmul.f32 %v294, 1.442695
  %v344 = vpow.pop %v343
  %v345 = vmul.f32 %v295, 1.442695
  %v346 = vpow.pop %v345
  %v347 = vmul.f32 %v296, 1.442695
  %v348 = vpow.pop %v347
  %v349 = vmul.f32 %v297, 1.442695
  %v350 = vpow.pop %v349
  %v351 = vmul.f32 %v298, 1.442695
  %v352 = vpow.pop %v351
  %v353 = vmul.f32 %v299, 1.442695
  %v354 = vpow.pop %v353
  %v355 = vmul.f32 %v300, 1.442695
  %v356 = vpow.pop %v355
  %v357 = vmul.f32 %v301, 1.442695
  %v358 = vpow.pop %v357
  %v359 = vmul.f32 %v302, 1.442695
  %v360 = vpow.pop %v359
  %v361 = vmul.f32 %v303, 1.442695
  %v362 = vpow.pop %v361
  %v363 = vmul.f32 %v304, 1.442695
  %v364 = vpow.pop %v363
  %v365 = vmul.f32 %v305, 1.442695
  %v366 = vpow.pop %v365
  %v367 = vmul.f32 %v306, 1.442695
  %v368 = vpow.pop %v367
  %v369 = vmul.f32 %v307, 1.442695
  %v370 = vpow.pop %v369
  %v371 = vmul.f32 %v308, 1.442695
  %v372 = vpow.pop %v371
  %v373 = vadd.f32 %v310, 1.0
  %v374 = vadd.f32 %v312, 1.0
  %v375 = vadd.f32 %v314, 1.0
  %v376 = vadd.f32 %v316, 1.0
  %v377 = vadd.f32 %v318, 1.0
  %v378 = vadd.f32 %v320, 1.0
  %v379 = vadd.f32 %v322, 1.0
  %v380 = vadd.f32 %v324, 1.0
  %v381 = vadd.f32 %v326, 1.0
  %v382 = vadd.f32 %v328, 1.0
  %v383 = vadd.f32 %v330, 1.0
  %v384 = vadd.f32 %v332, 1.0
  %v385 = vadd.f32 %v334, 1.0
  %v386 = vadd.f32 %v336, 1.0
  %v387 = vadd.f32 %v338, 1.0
  %v388 = vadd.f32 %v340, 1.0
  %v389 = vadd.f32 %v342, 1.0
  %v390 = vadd.f32 %v344, 1.0
  %v391 = vadd.f32 %v346, 1.0
  %v392 = vadd.f32 %v348, 1.0
  %v393 = vadd.f32 %v350, 1.0
  %v394 = vadd.f32 %v352, 1.0
  %v395 = vadd.f32 %v354, 1.0
  %v396 = vadd.f32 %v356, 1.0
  %v397 = vadd.f32 %v358, 1.0
  %v398 = vadd.f32 %v360, 1.0
  %v399 = vadd.f32 %v362, 1.0
  %v400 = vadd.f32 %v364, 1.0
  %v401 = vadd.f32 %v366, 1.0
  %v402 = vadd.f32 %v368, 1.0
  %v403 = vadd.f32 %v370, 1.0
  %v404 = vadd.f32 %v372, 1.0
  %v405 = vrcp.pop %v373
  %v406 = vmul.f32 %v373, %v405
  %v407 = vsub.f32 1.0, %v406
  %v408 = vmul.f32 %v405, %v407
  %v409 = vadd.f32 %v405, %v408
  %vm410 = vweird.f32 %v373
  %vm411 = vweird.f32 %v405
  %vm412 = vmor %vm410, %vm411
  %v413 = vsel %vm412, %v405, %v409
  %v414 = vand.u32 2147483647, %v373
  %vm415 = vcmp.eq.f32.partialorder %v414, 8.507059e+37
  %v416 = vand.u32 %v373, 2147483648
  %v417 = vor.u32 1.1754944e-38, %v416
  %v418 = vsel %vm415, %v417, %v413
  %v419 = vmul.f32 1.0, %v418
  %v420 = vrcp.pop %v374
  %v421 = vmul.f32 %v374, %v420
  %v422 = vsub.f32 1.0, %v421
  %v423 = vmul.f32 %v420, %v422
  %v424 = vadd.f32 %v420, %v423
  %vm425 = vweird.f32 %v374
  %vm426 = vweird.f32 %v420
  %vm427 = vmor %vm425, %vm426
  %v428 = vsel %vm427, %v420, %v424
  %v429 = vand.u32 2147483647, %v374
  %vm430 = vcmp.eq.f32.partialorder %v429, 8.507059e+37
  %v431 = vand.u32 %v374, 2147483648
  %v432 = vor.u32 1.1754944e-38, %v431
  %v433 = vsel %vm430, %v432, %v428
  %v434 = vmul.f32 1.0, %v433
  %v435 = vrcp.pop %v375
  %v436 = vmul.f32 %v375, %v435
  %v437 = vsub.f32 1.0, %v436
  %v438 = vmul.f32 %v435, %v437
  %v439 = vadd.f32 %v435, %v438
  %vm440 = vweird.f32 %v375
  %vm441 = vweird.f32 %v435
  %vm442 = vmor %vm440, %vm441
  %v443 = vsel %vm442, %v435, %v439
  %v444 = vand.u32 2147483647, %v375
  %vm445 = vcmp.eq.f32.partialorder %v444, 8.507059e+37
  %v446 = vand.u32 %v375, 2147483648
  %v447 = vor.u32 1.1754944e-38, %v446
  %v448 = vsel %vm445, %v447, %v443
  %v449 = vmul.f32 1.0, %v448
  %v450 = vrcp.pop %v376
  %v451 = vmul.f32 %v376, %v450
  %v452 = vsub.f32 1.0, %v451
  %v453 = vmul.f32 %v450, %v452
  %v454 = vadd.f32 %v450, %v453
  %vm455 = vweird.f32 %v376
  %vm456 = vweird.f32 %v450
  %vm457 = vmor %vm455, %vm456
  %v458 = vsel %vm457, %v450, %v454
  %v459 = vand.u32 2147483647, %v376
  %vm460 = vcmp.eq.f32.partialorder %v459, 8.507059e+37
  %v461 = vand.u32 %v376, 2147483648
  %v462 = vor.u32 1.1754944e-38, %v461
  %v463 = vsel %vm460, %v462, %v458
  %v464 = vmul.f32 1.0, %v463
  %v465 = vrcp.pop %v377
  %v466 = vmul.f32 %v377, %v465
  %v467 = vsub.f32 1.0, %v466
  %v468 = vmul.f32 %v465, %v467
  %v469 = vadd.f32 %v465, %v468
  %vm470 = vweird.f32 %v377
  %vm471 = vweird.f32 %v465
  %vm472 = vmor %vm470, %vm471
  %v473 = vsel %vm472, %v465, %v469
  %v474 = vand.u32 2147483647, %v377
  %vm475 = vcmp.eq.f32.partialorder %v474, 8.507059e+37
  %v476 = vand.u32 %v377, 2147483648
  %v477 = vor.u32 1.1754944e-38, %v476
  %v478 = vsel %vm475, %v477, %v473
  %v479 = vmul.f32 1.0, %v478
  %v480 = vrcp.pop %v378
  %v481 = vmul.f32 %v378, %v480
  %v482 = vsub.f32 1.0, %v481
  %v483 = vmul.f32 %v480, %v482
  %v484 = vadd.f32 %v480, %v483
  %vm485 = vweird.f32 %v378
  %vm486 = vweird.f32 %v480
  %vm487 = vmor %vm485, %vm486
  %v488 = vsel %vm487, %v480, %v484
  %v489 = vand.u32 2147483647, %v378
  %vm490 = vcmp.eq.f32.partialorder %v489, 8.507059e+37
  %v491 = vand.u32 %v378, 2147483648
  %v492 = vor.u32 1.1754944e-38, %v491
  %v493 = vsel %vm490, %v492, %v488
  %v494 = vmul.f32 1.0, %v493
  %v495 = vrcp.pop %v379
  %v496 = vmul.f32 %v379, %v495
  %v497 = vsub.f32 1.0, %v496
  %v498 = vmul.f32 %v495, %v497
  %v499 = vadd.f32 %v495, %v498
  %vm500 = vweird.f32 %v379
  %vm501 = vweird.f32 %v495
  %vm502 = vmor %vm500, %vm501
  %v503 = vsel %vm502, %v495, %v499
  %v504 = vand.u32 2147483647, %v379
  %vm505 = vcmp.eq.f32.partialorder %v504, 8.507059e+37
  %v506 = vand.u32 %v379, 2147483648
  %v507 = vor.u32 1.1754944e-38, %v506
  %v508 = vsel %vm505, %v507, %v503
  %v509 = vmul.f32 1.0, %v508
  %v510 = vrcp.pop %v380
  %v511 = vmul.f32 %v380, %v510
  %v512 = vsub.f32 1.0, %v511
  %v513 = vmul.f32 %v510, %v512
  %v514 = vadd.f32 %v510, %v513
  %vm515 = vweird.f32 %v380
  %vm516 = vweird.f32 %v510
  %vm517 = vmor %vm515, %vm516
  %v518 = vsel %vm517, %v510, %v514
  %v519 = vand.u32 2147483647, %v380
  %vm520 = vcmp.eq.f32.partialorder %v519, 8.507059e+37
  %v521 = vand.u32 %v380, 2147483648
  %v522 = vor.u32 1.1754944e-38, %v521
  %v523 = vsel %vm520, %v522, %v518
  %v524 = vmul.f32 1.0, %v523
  %v525 = vrcp.pop %v381
  %v526 = vmul.f32 %v381, %v525
  %v527 = vsub.f32 1.0, %v526
  %v528 = vmul.f32 %v525, %v527
  %v529 = vadd.f32 %v525, %v528
  %vm530 = vweird.f32 %v381
  %vm531 = vweird.f32 %v525
  %vm532 = vmor %vm530, %vm531
  %v533 = vsel %vm532, %v525, %v529
  %v534 = vand.u32 2147483647, %v381
  %vm535 = vcmp.eq.f32.partialorder %v534, 8.507059e+37
  %v536 = vand.u32 %v381, 2147483648
  %v537 = vor.u32 1.1754944e-38, %v536
  %v538 = vsel %vm535, %v537, %v533
  %v539 = vmul.f32 1.0, %v538
  %v540 = vrcp.pop %v382
  %v541 = vmul.f32 %v382, %v540
  %v542 = vsub.f32 1.0, %v541
  %v543 = vmul.f32 %v540, %v542
  %v544 = vadd.f32 %v540, %v543
  %vm545 = vweird.f32 %v382
  %vm546 = vweird.f32 %v540
  %vm547 = vmor %vm545, %vm546
  %v548 = vsel %vm547, %v540, %v544
  %v549 = vand.u32 2147483647, %v382
  %vm550 = vcmp.eq.f32.partialorder %v549, 8.507059e+37
  %v551 = vand.u32 %v382, 2147483648
  %v552 = vor.u32 1.1754944e-38, %v551
  %v553 = vsel %vm550, %v552, %v548
  %v554 = vmul.f32 1.0, %v553
  %v555 = vrcp.pop %v383
  %v556 = vmul.f32 %v383, %v555
  %v557 = vsub.f32 1.0, %v556
  %v558 = vmul.f32 %v555, %v557
  %v559 = vadd.f32 %v555, %v558
  %vm560 = vweird.f32 %v383
  %vm561 = vweird.f32 %v555
  %vm562 = vmor %vm560, %vm561
  %v563 = vsel %vm562, %v555, %v559
  %v564 = vand.u32 2147483647, %v383
  %vm565 = vcmp.eq.f32.partialorder %v564, 8.507059e+37
  %v566 = vand.u32 %v383, 2147483648
  %v567 = vor.u32 1.1754944e-38, %v566
  %v568 = vsel %vm565, %v567, %v563
  %v569 = vmul.f32 1.0, %v568
  %v570 = vrcp.pop %v384
  %v571 = vmul.f32 %v384, %v570
  %v572 = vsub.f32 1.0, %v571
  %v573 = vmul.f32 %v570, %v572
  %v574 = vadd.f32 %v570, %v573
  %vm575 = vweird.f32 %v384
  %vm576 = vweird.f32 %v570
  %vm577 = vmor %vm575, %vm576
  %v578 = vsel %vm577, %v570, %v574
  %v579 = vand.u32 2147483647, %v384
  %vm580 = vcmp.eq.f32.partialorder %v579, 8.507059e+37
  %v581 = vand.u32 %v384, 2147483648
  %v582 = vor.u32 1.1754944e-38, %v581
  %v583 = vsel %vm580, %v582, %v578
  %v584 = vmul.f32 1.0, %v583
  %v585 = vrcp.pop %v385
  %v586 = vmul.f32 %v385, %v585
  %v587 = vsub.f32 1.0, %v586
  %v588 = vmul.f32 %v585, %v587
  %v589 = vadd.f32 %v585, %v588
  %vm590 = vweird.f32 %v385
  %vm591 = vweird.f32 %v585
  %vm592 = vmor %vm590, %vm591
  %v593 = vsel %vm592, %v585, %v589
  %v594 = vand.u32 2147483647, %v385
  %vm595 = vcmp.eq.f32.partialorder %v594, 8.507059e+37
  %v596 = vand.u32 %v385, 2147483648
  %v597 = vor.u32 1.1754944e-38, %v596
  %v598 = vsel %vm595, %v597, %v593
  %v599 = vmul.f32 1.0, %v598
  %v600 = vrcp.pop %v386
  %v601 = vmul.f32 %v386, %v600
  %v602 = vsub.f32 1.0, %v601
  %v603 = vmul.f32 %v600, %v602
  %v604 = vadd.f32 %v600, %v603
  %vm605 = vweird.f32 %v386
  %vm606 = vweird.f32 %v600
  %vm607 = vmor %vm605, %vm606
  %v608 = vsel %vm607, %v600, %v604
  %v609 = vand.u32 2147483647, %v386
  %vm610 = vcmp.eq.f32.partialorder %v609, 8.507059e+37
  %v611 = vand.u32 %v386, 2147483648
  %v612 = vor.u32 1.1754944e-38, %v611
  %v613 = vsel %vm610, %v612, %v608
  %v614 = vmul.f32 1.0, %v613
  %v615 = vrcp.pop %v387
  %v616 = vmul.f32 %v387, %v615
  %v617 = vsub.f32 1.0, %v616
  %v618 = vmul.f32 %v615, %v617
  %v619 = vadd.f32 %v615, %v618
  %vm620 = vweird.f32 %v387
  %vm621 = vweird.f32 %v615
  %vm622 = vmor %vm620, %vm621
  %v623 = vsel %vm622, %v615, %v619
  %v624 = vand.u32 2147483647, %v387
  %vm625 = vcmp.eq.f32.partialorder %v624, 8.507059e+37
  %v626 = vand.u32 %v387, 2147483648
  %v627 = vor.u32 1.1754944e-38, %v626
  %v628 = vsel %vm625, %v627, %v623
  %v629 = vmul.f32 1.0, %v628
  %v630 = vrcp.pop %v388
  %v631 = vmul.f32 %v388, %v630
  %v632 = vsub.f32 1.0, %v631
  %v633 = vmul.f32 %v630, %v632
  %v634 = vadd.f32 %v630, %v633
  %vm635 = vweird.f32 %v388
  %vm636 = vweird.f32 %v630
  %vm637 = vmor %vm635, %vm636
  %v638 = vsel %vm637, %v630, %v634
  %v639 = vand.u32 2147483647, %v388
  %vm640 = vcmp.eq.f32.partialorder %v639, 8.507059e+37
  %v641 = vand.u32 %v388, 2147483648
  %v642 = vor.u32 1.1754944e-38, %v641
  %v643 = vsel %vm640, %v642, %v638
  %v644 = vmul.f32 1.0, %v643
  %v645 = vrcp.pop %v389
  %v646 = vmul.f32 %v389, %v645
  %v647 = vsub.f32 1.0, %v646
  %v648 = vmul.f32 %v645, %v647
  %v649 = vadd.f32 %v645, %v648
  %vm650 = vweird.f32 %v389
  %vm651 = vweird.f32 %v645
  %vm652 = vmor %vm650, %vm651
  %v653 = vsel %vm652, %v645, %v649
  %v654 = vand.u32 2147483647, %v389
  %vm655 = vcmp.eq.f32.partialorder %v654, 8.507059e+37
  %v656 = vand.u32 %v389, 2147483648
  %v657 = vor.u32 1.1754944e-38, %v656
  %v658 = vsel %vm655, %v657, %v653
  %v659 = vmul.f32 1.0, %v658
  %v660 = vrcp.pop %v390
  %v661 = vmul.f32 %v390, %v660
  %v662 = vsub.f32 1.0, %v661
  %v663 = vmul.f32 %v660, %v662
  %v664 = vadd.f32 %v660, %v663
  %vm665 = vweird.f32 %v390
  %vm666 = vweird.f32 %v660
  %vm667 = vmor %vm665, %vm666
  %v668 = vsel %vm667, %v660, %v664
  %v669 = vand.u32 2147483647, %v390
  %vm670 = vcmp.eq.f32.partialorder %v669, 8.507059e+37
  %v671 = vand.u32 %v390, 2147483648
  %v672 = vor.u32 1.1754944e-38, %v671
  %v673 = vsel %vm670, %v672, %v668
  %v674 = vmul.f32 1.0, %v673
  %v675 = vrcp.pop %v391
  %v676 = vmul.f32 %v391, %v675
  %v677 = vsub.f32 1.0, %v676
  %v678 = vmul.f32 %v675, %v677
  %v679 = vadd.f32 %v675, %v678
  %vm680 = vweird.f32 %v391
  %vm681 = vweird.f32 %v675
  %vm682 = vmor %vm680, %vm681
  %v683 = vsel %vm682, %v675, %v679
  %v684 = vand.u32 2147483647, %v391
  %vm685 = vcmp.eq.f32.partialorder %v684, 8.507059e+37
  %v686 = vand.u32 %v391, 2147483648
  %v687 = vor.u32 1.1754944e-38, %v686
  %v688 = vsel %vm685, %v687, %v683
  %v689 = vmul.f32 1.0, %v688
  %v690 = vrcp.pop %v392
  %v691 = vmul.f32 %v392, %v690
  %v692 = vsub.f32 1.0, %v691
  %v693 = vmul.f32 %v690, %v692
  %v694 = vadd.f32 %v690, %v693
  %vm695 = vweird.f32 %v392
  %vm696 = vweird.f32 %v690
  %vm697 = vmor %vm695, %vm696
  %v698 = vsel %vm697, %v690, %v694
  %v699 = vand.u32 2147483647, %v392
  %vm700 = vcmp.eq.f32.partialorder %v699, 8.507059e+37
  %v701 = vand.u32 %v392, 2147483648
  %v702 = vor.u32 1.1754944e-38, %v701
  %v703 = vsel %vm700, %v702, %v698
  %v704 = vmul.f32 1.0, %v703
  %v705 = vrcp.pop %v393
  %v706 = vmul.f32 %v393, %v705
  %v707 = vsub.f32 1.0, %v706
  %v708 = vmul.f32 %v705, %v707
  %v709 = vadd.f32 %v705, %v708
  %vm710 = vweird.f32 %v393
  %vm711 = vweird.f32 %v705
  %vm712 = vmor %vm710, %vm711
  %v713 = vsel %vm712, %v705, %v709
  %v714 = vand.u32 2147483647, %v393
  %vm715 = vcmp.eq.f32.partialorder %v714, 8.507059e+37
  %v716 = vand.u32 %v393, 2147483648
  %v717 = vor.u32 1.1754944e-38, %v716
  %v718 = vsel %vm715, %v717, %v713
  %v719 = vmul.f32 1.0, %v718
  %v720 = vrcp.pop %v394
  %v721 = vmul.f32 %v394, %v720
  %v722 = vsub.f32 1.0, %v721
  %v723 = vmul.f32 %v720, %v722
  %v724 = vadd.f32 %v720, %v723
  %vm725 = vweird.f32 %v394
  %vm726 = vweird.f32 %v720
  %vm727 = vmor %vm725, %vm726
  %v728 = vsel %vm727, %v720, %v724
  %v729 = vand.u32 2147483647, %v394
  %vm730 = vcmp.eq.f32.partialorder %v729, 8.507059e+37
  %v731 = vand.u32 %v394, 2147483648
  %v732 = vor.u32 1.1754944e-38, %v731
  %v733 = vsel %vm730, %v732, %v728
  %v734 = vmul.f32 1.0, %v733
  %v735 = vrcp.pop %v395
  %v736 = vmul.f32 %v395, %v735
  %v737 = vsub.f32 1.0, %v736
  %v738 = vmul.f32 %v735, %v737
  %v739 = vadd.f32 %v735, %v738
  %vm740 = vweird.f32 %v395
  %vm741 = vweird.f32 %v735
  %vm742 = vmor %vm740, %vm741
  %v743 = vsel %vm742, %v735, %v739
  %v744 = vand.u32 2147483647, %v395
  %vm745 = vcmp.eq.f32.partialorder %v744, 8.507059e+37
  %v746 = vand.u32 %v395, 2147483648
  %v747 = vor.u32 1.1754944e-38, %v746
  %v748 = vsel %vm745, %v747, %v743
  %v749 = vmul.f32 1.0, %v748
  %v750 = vrcp.pop %v396
  %v751 = vmul.f32 %v396, %v750
  %v752 = vsub.f32 1.0, %v751
  %v753 = vmul.f32 %v750, %v752
  %v754 = vadd.f32 %v750, %v753
  %vm755 = vweird.f32 %v396
  %vm756 = vweird.f32 %v750
  %vm757 = vmor %vm755, %vm756
  %v758 = vsel %vm757, %v750, %v754
  %v759 = vand.u32 2147483647, %v396
  %vm760 = vcmp.eq.f32.partialorder %v759, 8.507059e+37
  %v761 = vand.u32 %v396, 2147483648
  %v762 = vor.u32 1.1754944e-38, %v761
  %v763 = vsel %vm760, %v762, %v758
  %v764 = vmul.f32 1.0, %v763
  %v765 = vrcp.pop %v397
  %v766 = vmul.f32 %v397, %v765
  %v767 = vsub.f32 1.0, %v766
  %v768 = vmul.f32 %v765, %v767
  %v769 = vadd.f32 %v765, %v768
  %vm770 = vweird.f32 %v397
  %vm771 = vweird.f32 %v765
  %vm772 = vmor %vm770, %vm771
  %v773 = vsel %vm772, %v765, %v769
  %v774 = vand.u32 2147483647, %v397
  %vm775 = vcmp.eq.f32.partialorder %v774, 8.507059e+37
  %v776 = vand.u32 %v397, 2147483648
  %v777 = vor.u32 1.1754944e-38, %v776
  %v778 = vsel %vm775, %v777, %v773
  %v779 = vmul.f32 1.0, %v778
  %v780 = vrcp.pop %v398
  %v781 = vmul.f32 %v398, %v780
  %v782 = vsub.f32 1.0, %v781
  %v783 = vmul.f32 %v780, %v782
  %v784 = vadd.f32 %v780, %v783
  %vm785 = vweird.f32 %v398
  %vm786 = vweird.f32 %v780
  %vm787 = vmor %vm785, %vm786
  %v788 = vsel %vm787, %v780, %v784
  %v789 = vand.u32 2147483647, %v398
  %vm790 = vcmp.eq.f32.partialorder %v789, 8.507059e+37
  %v791 = vand.u32 %v398, 2147483648
  %v792 = vor.u32 1.1754944e-38, %v791
  %v793 = vsel %vm790, %v792, %v788
  %v794 = vmul.f32 1.0, %v793
  %v795 = vrcp.pop %v399
  %v796 = vmul.f32 %v399, %v795
  %v797 = vsub.f32 1.0, %v796
  %v798 = vmul.f32 %v795, %v797
  %v799 = vadd.f32 %v795, %v798
  %vm800 = vweird.f32 %v399
  %vm801 = vweird.f32 %v795
  %vm802 = vmor %vm800, %vm801
  %v803 = vsel %vm802, %v795, %v799
  %v804 = vand.u32 2147483647, %v399
  %vm805 = vcmp.eq.f32.partialorder %v804, 8.507059e+37
  %v806 = vand.u32 %v399, 2147483648
  %v807 = vor.u32 1.1754944e-38, %v806
  %v808 = vsel %vm805, %v807, %v803
  %v809 = vmul.f32 1.0, %v808
  %v810 = vrcp.pop %v400
  %v811 = vmul.f32 %v400, %v810
  %v812 = vsub.f32 1.0, %v811
  %v813 = vmul.f32 %v810, %v812
  %v814 = vadd.f32 %v810, %v813
  %vm815 = vweird.f32 %v400
  %vm816 = vweird.f32 %v810
  %vm817 = vmor %vm815, %vm816
  %v818 = vsel %vm817, %v810, %v814
  %v819 = vand.u32 2147483647, %v400
  %vm820 = vcmp.eq.f32.partialorder %v819, 8.507059e+37
  %v821 = vand.u32 %v400, 2147483648
  %v822 = vor.u32 1.1754944e-38, %v821
  %v823 = vsel %vm820, %v822, %v818
  %v824 = vmul.f32 1.0, %v823
  %v825 = vrcp.pop %v401
  %v826 = vmul.f32 %v401, %v825
  %v827 = vsub.f32 1.0, %v826
  %v828 = vmul.f32 %v825, %v827
  %v829 = vadd.f32 %v825, %v828
  %vm830 = vweird.f32 %v401
  %vm831 = vweird.f32 %v825
  %vm832 = vmor %vm830, %vm831
  %v833 = vsel %vm832, %v825, %v829
  %v834 = vand.u32 2147483647, %v401
  %vm835 = vcmp.eq.f32.partialorder %v834, 8.507059e+37
  %v836 = vand.u32 %v401, 2147483648
  %v837 = vor.u32 1.1754944e-38, %v836
  %v838 = vsel %vm835, %v837, %v833
  %v839 = vmul.f32 1.0, %v838
  %v840 = vrcp.pop %v402
  %v841 = vmul.f32 %v402, %v840
  %v842 = vsub.f32 1.0, %v841
  %v843 = vmul.f32 %v840, %v842
  %v844 = vadd.f32 %v840, %v843
  %vm845 = vweird.f32 %v402
  %vm846 = vweird.f32 %v840
  %vm847 = vmor %vm845, %vm846
  %v848 = vsel %vm847, %v840, %v844
  %v849 = vand.u32 2147483647, %v402
  %vm850 = vcmp.eq.f32.partialorder %v849, 8.507059e+37
  %v851 = vand.u32 %v402, 2147483648
  %v852 = vor.u32 1.1754944e-38, %v851
  %v853 = vsel %vm850, %v852, %v848
  %v854 = vmul.f32 1.0, %v853
  %v855 = vrcp.pop %v403
  %v856 = vmul.f32 %v403, %v855
  %v857 = vsub.f32 1.0, %v856
  %v858 = vmul.f32 %v855, %v857
  %v859 = vadd.f32 %v855, %v858
  %vm860 = vweird.f32 %v403
  %vm861 = vweird.f32 %v855
  %vm862 = vmor %vm860, %vm861
  %v863 = vsel %vm862, %v855, %v859
  %v864 = vand.u32 2147483647, %v403
  %vm865 = vcmp.eq.f32.partialorder %v864, 8.507059e+37
  %v866 = vand.u32 %v403, 2147483648
  %v867 = vor.u32 1.1754944e-38, %v866
  %v868 = vsel %vm865, %v867, %v863
  %v869 = vmul.f32 1.0, %v868
  %v870 = vrcp.pop %v404
  %v871 = vmul.f32 %v404, %v870
  %v872 = vsub.f32 1.0, %v871
  %v873 = vmul.f32 %v870, %v872
  %v874 = vadd.f32 %v870, %v873
  %vm875 = vweird.f32 %v404
  %vm876 = vweird.f32 %v870
  %vm877 = vmor %vm875, %vm876
  %v878 = vsel %vm877, %v870, %v874
  %v879 = vand.u32 2147483647, %v404
  %vm880 = vcmp.eq.f32.partialorder %v879, 8.507059e+37
  %v881 = vand.u32 %v404, 2147483648
  %v882 = vor.u32 1.1754944e-38, %v881
  %v883 = vsel %vm880, %v882, %v878
  %v884 = vmul.f32 1.0, %v883
  %v885 = vmul.f32 %v189, %v419
  %v886 = vmul.f32 %v238, %v434
  %v887 = vmul.f32 %v191, %v449
  %v888 = vmul.f32 %v240, %v464
  %v889 = vmul.f32 %v194, %v479
  %v890 = vmul.f32 %v243, %v494
  %v891 = vmul.f32 %v196, %v509
  %v892 = vmul.f32 %v245, %v524
  %v893 = vmul.f32 %v199, %v539
  %v894 = vmul.f32 %v248, %v554
  %v895 = vmul.f32 %v201, %v569
  %v896 = vmul.f32 %v250, %v584
  %v897 = vmul.f32 %v204, %v599
  %v898 = vmul.f32 %v253, %v614
  %v899 = vmul.f32 %v206, %v629
  %v900 = vmul.f32 %v255, %v644
  %v901 = vmul.f32 %v209, %v659
  %v902 = vmul.f32 %v258, %v674
  %v903 = vmul.f32 %v211, %v689
  %v904 = vmul.f32 %v260, %v704
  %v905 = vmul.f32 %v214, %v719
  %v906 = vmul.f32 %v263, %v734
  %v907 = vmul.f32 %v216, %v749
  %v908 = vmul.f32 %v265, %v764
  %v909 = vmul.f32 %v219, %v779
  %v910 = vmul.f32 %v268, %v794
  %v911 = vmul.f32 %v221, %v809
  %v912 = vmul.f32 %v270, %v824
  %v913 = vmul.f32 %v224, %v839
  %v914 = vmul.f32 %v273, %v854
  %v915 = vmul.f32 %v226, %v869
  %v916 = vmul.f32 %v275, %v884
  %v917 = vpack.c.bf16 %v887, %v885
  %v918 = vpack.c.bf16 %v888, %v886
  %v919 = vpack.c.bf16 %v891, %v889
  %v920 = vpack.c.bf16 %v892, %v890
  %v921 = vpack.c.bf16 %v895, %v893
  %v922 = vpack.c.bf16 %v896, %v894
  %v923 = vpack.c.bf16 %v899, %v897
  %v924 = vpack.c.bf16 %v900, %v898
  %v925 = vpack.c.bf16 %v903, %v901
  %v926 = vpack.c.bf16 %v904, %v902
  %v927 = vpack.c.bf16 %v907, %v905
  %v928 = vpack.c.bf16 %v908, %v906
  %v929 = vpack.c.bf16 %v911, %v909
  %v930 = vpack.c.bf16 %v912, %v910
  %v931 = vpack.c.bf16 %v915, %v913
  %v932 = vpack.c.bf16 %v916, %v914
  %v965 = vunpack.c.l.b16 %v36
  %v966 = vunpack.c.l.b16 %v37
  %v967 = vunpack.c.l.b16 %v38
  %v968 = vunpack.c.l.b16 %v39
  %v969 = vunpack.c.l.b16 %v40
  %v970 = vunpack.c.l.b16 %v41
  %v971 = vunpack.c.l.b16 %v42
  %v972 = vunpack.c.l.b16 %v43
  %v973 = vunpack.c.l.b16 %v44
  %v974 = vunpack.c.l.b16 %v45
  %v975 = vunpack.c.l.b16 %v46
  %v976 = vunpack.c.l.b16 %v47
  %v977 = vunpack.c.l.b16 %v48
  %v978 = vunpack.c.l.b16 %v49
  %v979 = vunpack.c.l.b16 %v50
  %v980 = vunpack.c.l.b16 %v51
  %v981 = vunpack.c.l.b16 %v52
  %v982 = vunpack.c.l.b16 %v53
  %v983 = vunpack.c.l.b16 %v54
  %v984 = vunpack.c.l.b16 %v55
  %v985 = vunpack.c.l.b16 %v56
  %v986 = vunpack.c.l.b16 %v57
  %v987 = vunpack.c.l.b16 %v58
  %v988 = vunpack.c.l.b16 %v59
  %v989 = vunpack.c.l.b16 %v60
  %v990 = vunpack.c.l.b16 %v61
  %v991 = vunpack.c.l.b16 %v62
  %v992 = vunpack.c.l.b16 %v63
  %v993 = vunpack.c.l.b16 %v64
  %v994 = vunpack.c.l.b16 %v65
  %v995 = vunpack.c.l.b16 %v66
  %v996 = vunpack.c.l.b16 %v67
  %v997 = vpack.c.b16 %v966, %v965
  %v998 = vpack.c.b16 %v968, %v967
  %v999 = vpack.c.b16 %v970, %v969
  %v1000 = vpack.c.b16 %v972, %v971
  %v1001 = vpack.c.b16 %v974, %v973
  %v1002 = vpack.c.b16 %v976, %v975
  %v1003 = vpack.c.b16 %v978, %v977
  %v1004 = vpack.c.b16 %v980, %v979
  %v1005 = vpack.c.b16 %v982, %v981
  %v1006 = vpack.c.b16 %v984, %v983
  %v1007 = vpack.c.b16 %v986, %v985
  %v1008 = vpack.c.b16 %v988, %v987
  %v1009 = vpack.c.b16 %v990, %v989
  %v1010 = vpack.c.b16 %v992, %v991
  %v1011 = vpack.c.b16 %v994, %v993
  %v1012 = vpack.c.b16 %v996, %v995
  %1029 = vmatpush.bf16.msra.mxu0 %v1004
  %1030 = vmatpush.bf16.msra.mxu0 %v1003
  %1031 = vmatpush.bf16.msra.mxu0 %v1002
  %1032 = vmatpush.bf16.msra.mxu0 %v1001
  %1033 = vmatpush.bf16.msra.mxu0 %v1000
  %1034 = vmatpush.bf16.msra.mxu0 %v999
  %1035 = vmatpush.bf16.msra.mxu0 %v998
  %1036 = vmatpush.bf16.msra.mxu0 %v997
  %1037 = vmatmul.bf16.gmra.mxu0 %v917
  %v1038 = vpop.f32.mrf.mxu0
  %v1039 = vadd.f32 0.0, %v1038
  %v1040 = vpop.f32.mrf.mxu0
  %v1041 = vadd.f32 0.0, %v1040
  %1042 = vmatmul.bf16.gmra.mxu0 %v919
  %v1043 = vpop.f32.mrf.mxu0
  %v1044 = vadd.f32 0.0, %v1043
  %v1045 = vpop.f32.mrf.mxu0
  %v1046 = vadd.f32 0.0, %v1045
  %1047 = vmatmul.bf16.gmra.mxu0 %v921
  %v1048 = vpop.f32.mrf.mxu0
  %v1049 = vadd.f32 0.0, %v1048
  %v1050 = vpop.f32.mrf.mxu0
  %v1051 = vadd.f32 0.0, %v1050
  %1052 = vmatmul.bf16.gmra.mxu0 %v923
  %v1053 = vpop.f32.mrf.mxu0
  %v1054 = vadd.f32 0.0, %v1053
  %v1055 = vpop.f32.mrf.mxu0
  %v1056 = vadd.f32 0.0, %v1055
  %1057 = vmatmul.bf16.gmra.mxu0 %v925
  %v1058 = vpop.f32.mrf.mxu0
  %v1059 = vadd.f32 0.0, %v1058
  %v1060 = vpop.f32.mrf.mxu0
  %v1061 = vadd.f32 0.0, %v1060
  %1062 = vmatmul.bf16.gmra.mxu0 %v927
  %v1063 = vpop.f32.mrf.mxu0
  %v1064 = vadd.f32 0.0, %v1063
  %v1065 = vpop.f32.mrf.mxu0
  %v1066 = vadd.f32 0.0, %v1065
  %1067 = vmatmul.bf16.gmra.mxu0 %v929
  %v1068 = vpop.f32.mrf.mxu0
  %v1069 = vadd.f32 0.0, %v1068
  %v1070 = vpop.f32.mrf.mxu0
  %v1071 = vadd.f32 0.0, %v1070
  %1072 = vmatmul.bf16.gmra.mxu0 %v931
  %v1073 = vpop.f32.mrf.mxu0
  %v1074 = vadd.f32 0.0, %v1073
  %v1075 = vpop.f32.mrf.mxu0
  %v1076 = vadd.f32 0.0, %v1075
  %1077 = vdwg.mxu0
  %1078 = vmatpush.bf16.msra.mxu0 %v1012
  %1079 = vmatpush.bf16.msra.mxu0 %v1011
  %1080 = vmatpush.bf16.msra.mxu0 %v1010
  %1081 = vmatpush.bf16.msra.mxu0 %v1009
  %1082 = vmatpush.bf16.msra.mxu0 %v1008
  %1083 = vmatpush.bf16.msra.mxu0 %v1007
  %1084 = vmatpush.bf16.msra.mxu0 %v1006
  %1085 = vmatpush.bf16.msra.mxu0 %v1005
  %1086 = vmatmul.bf16.gmra.mxu0 %v918
  %v1087 = vpop.f32.mrf.mxu0
  %v1088 = vadd.f32 %v1039, %v1087
  %v1089 = vpop.f32.mrf.mxu0
  %v1090 = vadd.f32 %v1041, %v1089
  %1091 = vmatmul.bf16.gmra.mxu0 %v920
  %v1092 = vpop.f32.mrf.mxu0
  %v1093 = vadd.f32 %v1044, %v1092
  %v1094 = vpop.f32.mrf.mxu0
  %v1095 = vadd.f32 %v1046, %v1094
  %1096 = vmatmul.bf16.gmra.mxu0 %v922
  %v1097 = vpop.f32.mrf.mxu0
  %v1098 = vadd.f32 %v1049, %v1097
  %v1099 = vpop.f32.mrf.mxu0
  %v1100 = vadd.f32 %v1051, %v1099
  %1101 = vmatmul.bf16.gmra.mxu0 %v924
  %v1102 = vpop.f32.mrf.mxu0
  %v1103 = vadd.f32 %v1054, %v1102
  %v1104 = vpop.f32.mrf.mxu0
  %v1105 = vadd.f32 %v1056, %v1104
  %1106 = vmatmul.bf16.gmra.mxu0 %v926
  %v1107 = vpop.f32.mrf.mxu0
  %v1108 = vadd.f32 %v1059, %v1107
  %v1109 = vpop.f32.mrf.mxu0
  %v1110 = vadd.f32 %v1061, %v1109
  %1111 = vmatmul.bf16.gmra.mxu0 %v928
  %v1112 = vpop.f32.mrf.mxu0
  %v1113 = vadd.f32 %v1064, %v1112
  %v1114 = vpop.f32.mrf.mxu0
  %v1115 = vadd.f32 %v1066, %v1114
  %1116 = vmatmul.bf16.gmra.mxu0 %v930
  %v1117 = vpop.f32.mrf.mxu0
  %v1118 = vadd.f32 %v1069, %v1117
  %v1119 = vpop.f32.mrf.mxu0
  %v1120 = vadd.f32 %v1071, %v1119
  %1121 = vmatmul.bf16.gmra.mxu0 %v932
  %v1122 = vpop.f32.mrf.mxu0
  %v1123 = vadd.f32 %v1074, %v1122
  %v1124 = vpop.f32.mrf.mxu0
  %v1125 = vadd.f32 %v1076, %v1124
  %1126 = vdwg.mxu0
  %v1128 = vperm.slane %v69, 0
  %v1130 = vadd.f32 %v1088, %v1128
  %v1131 = vadd.f32 %v1090, %v1128
  %v1132 = vadd.f32 %v1093, %v1128
  %v1133 = vadd.f32 %v1095, %v1128
  %v1134 = vadd.f32 %v1098, %v1128
  %v1135 = vadd.f32 %v1100, %v1128
  %v1136 = vadd.f32 %v1103, %v1128
  %v1137 = vadd.f32 %v1105, %v1128
  %v1138 = vadd.f32 %v1108, %v1128
  %v1139 = vadd.f32 %v1110, %v1128
  %v1140 = vadd.f32 %v1113, %v1128
  %v1141 = vadd.f32 %v1115, %v1128
  %v1142 = vadd.f32 %v1118, %v1128
  %v1143 = vadd.f32 %v1120, %v1128
  %v1144 = vadd.f32 %v1123, %v1128
  %v1145 = vadd.f32 %v1125, %v1128
  %vm1146 = vcmask 97280
  %1147 = vst.msk [vmem:[%s5] sm:$0xff] %vm1146, %v1130
  %1148 = vst.msk [vmem:[%s5 + $0x8] sm:$0xff] %vm1146, %v1131
  %1149 = vst.msk [vmem:[%s5 + $0x10] sm:$0xff] %vm1146, %v1132
  %1150 = vst.msk [vmem:[%s5 + $0x18] sm:$0xff] %vm1146, %v1133
  %1151 = vst.msk [vmem:[%s5 + $0x20] sm:$0xff] %vm1146, %v1134
  %1152 = vst.msk [vmem:[%s5 + $0x28] sm:$0xff] %vm1146, %v1135
  %1153 = vst.msk [vmem:[%s5 + $0x30] sm:$0xff] %vm1146, %v1136
  %1154 = vst.msk [vmem:[%s5 + $0x38] sm:$0xff] %vm1146, %v1137
  %1155 = vst.msk [vmem:[%s5 + $0x40] sm:$0xff] %vm1146, %v1138
  %1156 = vst.msk [vmem:[%s5 + $0x48] sm:$0xff] %vm1146, %v1139
  %1157 = vst.msk [vmem:[%s5 + $0x50] sm:$0xff] %vm1146, %v1140
  %1158 = vst.msk [vmem:[%s5 + $0x58] sm:$0xff] %vm1146, %v1141
  %1159 = vst.msk [vmem:[%s5 + $0x60] sm:$0xff] %vm1146, %v1142
  %1160 = vst.msk [vmem:[%s5 + $0x68] sm:$0xff] %vm1146, %v1143
  %1161 = vst.msk [vmem:[%s5 + $0x70] sm:$0xff] %vm1146, %v1144
  %1162 = vst.msk [vmem:[%s5 + $0x78] sm:$0xff] %vm1146, %v1145
  // Predicated region
  $region22: #{regression_task_forward.1} parent=0 // pred_check
    _
  $region23: #{regression_task_forward.1} parent=0 // pred_check_branch
    %1164 = sbr.rel (0) target = $region25
  $region24: #{regression_task_forward.1} parent=0 // pred_region
    _
  $region25: #{regression_task_forward.1} parent=0 // pred_fallthru
    _
  // Predicated region
  $region26: #{regression_task_forward.1} parent=0 // pred_check
    _
  $region27: #{regression_task_forward.1} parent=0 // pred_check_branch
    %1166 = sbr.rel (0) target = $region29
  $region28: #{regression_task_forward.1} parent=0 // pred_region
    _
  $region29: #{regression_task_forward.1} parent=0 // pred_fallthru
    _

</llo_original>
